<compile_context>
chip_gen: v7x
topology: tpu7x:2x2x1
jax: 0.10.0
libtpu: 0.0.40
codegen_flags: <defaults>
</compile_context>

<pallas_src>
import functools
import math

import jax
import jax.numpy as jnp
from jax.experimental import pallas as pl
from jax.experimental.pallas import tpu as pltpu


def _upsample_kernel(x_ref, w_ref, b_ref, o_ref):
    # x_ref: (1, H, W*Cin)   w_ref: (W*Cin, 4*W*Cout)
    # b_ref: (1, 4*W*Cout)   o_ref: (1, H, 4*W*Cout)
    y = jnp.dot(x_ref[0], w_ref[...], preferred_element_type=jnp.float32)
    o_ref[0] = (y + b_ref[...]).astype(o_ref.dtype)


def upsample(x, weight, bias, *, out_channel):
    """ConvTranspose2d(kernel=2, stride=2) on a token tensor.

    x:      (B, L, C_in), L = H*W row-major tokens.
    weight: (C_in, C_out, 2, 2)   -- PyTorch ConvTranspose2d layout.
    bias:   (C_out,)
    returns (B, 4*L, C_out)
    """
    B, L, Cin = x.shape
    H = W = int(math.sqrt(L))
    Cout = out_channel

    # ---- fold the 2x2 pixel shuffle into the weight (wrapper-side, tiny) ----
    # wbig[j*Cin + ci, ((kh*W + j')*2 + kw)*Cout + co]
    #     = delta(j, j') * weight[ci, co, kh, kw]
    blk = weight.transpose(2, 0, 3, 1).reshape(2, Cin, 2 * Cout)  # (kh, ci, kw*Cout+co)
    eye = jnp.eye(W, dtype=weight.dtype)
    wbig = jnp.einsum('jJ,hcd->jchJd', eye, blk).reshape(W * Cin, 4 * W * Cout)
    bbig = jnp.tile(bias, 4 * W).reshape(1, 4 * W * Cout)

    # ---- lane-dense, contiguous (zero-cost) input view ----------------------
    x_rows = x.reshape(B, H, W * Cin)

    out_rows = pl.pallas_call(
        _upsample_kernel,
        grid=(B,),
        out_shape=jax.ShapeDtypeStruct((B, H, 4 * W * Cout), x.dtype),
        in_specs=[
            pl.BlockSpec((1, H, W * Cin), lambda b: (b, 0, 0)),
            pl.BlockSpec((W * Cin, 4 * W * Cout), lambda b: (0, 0)),
            pl.BlockSpec((1, 4 * W * Cout), lambda b: (0, 0)),
        ],
        out_specs=pl.BlockSpec((1, H, 4 * W * Cout), lambda b: (b, 0, 0)),
        compiler_params=pltpu.CompilerParams(dimension_semantics=("parallel",)),
    )(x_rows, wbig, bbig)

    # (B, H, [kh, j, kw, co]) flattens contiguously to (B, (2H)*(2W), Cout).
    return out_rows.reshape(B, 4 * L, Cout)


def upsample_ref(x, weight, bias):
    """Pure-JAX reference (same math as torch ConvTranspose2d k=2, s=2)."""
    B, L, Cin = x.shape
    H = W = int(math.sqrt(L))
    Cout = weight.shape[1]
    ximg = x.reshape(B, H, W, Cin)
    y = jnp.einsum('bhwc,cokl->bhkwlo', ximg, weight)   # (B, H, 2, W, 2, Cout)
    y = y.reshape(B, 2 * H, 2 * W, Cout) + bias
    return y.reshape(B, 4 * L, Cout)


if __name__ == "__main__":
    B, RES, CIN, COUT = 2, 16, 16, 8
    L = RES * RES

    key = jax.random.PRNGKey(0)
    kx, kw, kb = jax.random.split(key, 3)
    x = jax.random.normal(kx, (B, L, CIN), jnp.float32)
    weight = jax.random.normal(kw, (CIN, COUT, 2, 2), jnp.float32) * 0.1
    bias = jax.random.normal(kb, (COUT,), jnp.float32) * 0.02

    fwd = jax.jit(functools.partial(upsample, out_channel=COUT))
    out = jax.block_until_ready(fwd(x, weight, bias))

    assert out.shape == (B, 4 * L, COUT), out.shape
    assert bool(jnp.all(jnp.isfinite(out)))

    ref = upsample_ref(x, weight, bias)
    err = float(jnp.max(jnp.abs(out - ref)))
    assert err < 5e-2, f"max abs error vs reference: {err}"

    print("KERNEL_OK")
</pallas_src>

<mosaic_0001>
module attributes {stable_mosaic.version = 11 : i64} {
  func.func @_upsample_kernel(%arg0: i32, %arg1: memref<1x16x256xf32, #tpu.memory_space<vmem>>, %arg2: memref<256x512xf32, #tpu.memory_space<vmem>>, %arg3: memref<1x512xf32, #tpu.memory_space<vmem>>, %arg4: memref<1x16x512xf32, #tpu.memory_space<vmem>>) attributes {dimension_semantics = [#tpu.dimension_semantics<parallel>], iteration_bounds = array<i64: 2>, scalar_prefetch = 0 : i64, scratch_operands = 0 : i64, tpu.core_type = #tpu.core_type<tc>, window_params = [{transform_indices = @transform_0, window_bounds = array<i64: 1, 16, 256>}, {pipeline_mode = #tpu.pipeline_mode<synchronous>, transform_indices = @transform_1, window_bounds = array<i64: 256, 512>}, {pipeline_mode = #tpu.pipeline_mode<synchronous>, transform_indices = @transform_2, window_bounds = array<i64: 1, 512>}, {transform_indices = @transform_3, window_bounds = array<i64: 1, 16, 512>}]} {
    %c0 = arith.constant 0 : index
    %c0_0 = arith.constant 0 : index
    %c0_1 = arith.constant 0 : index
    %0 = vector.load %arg1[%c0, %c0_0, %c0_1] : memref<1x16x256xf32, #tpu.memory_space<vmem>>, vector<1x16x256xf32>
    %1 = vector.shape_cast %0 : vector<1x16x256xf32> to vector<16x256xf32>
    %c0_2 = arith.constant 0 : index
    %c0_3 = arith.constant 0 : index
    %2 = vector.load %arg2[%c0_2, %c0_3] : memref<256x512xf32, #tpu.memory_space<vmem>>, vector<256x512xf32>
    %cst = arith.constant dense<0.000000e+00> : vector<16x512xf32>
    %3 = tpu.matmul %1, %2, %cst {dimension_numbers = #tpu.dot_dimension_numbers<[1], [0], [0], [1], [0, 0, 1, 1], [], []>} : vector<16x256xf32>, vector<256x512xf32>, vector<16x512xf32> -> vector<16x512xf32>
    %c0_4 = arith.constant 0 : index
    %c0_5 = arith.constant 0 : index
    %4 = vector.load %arg3[%c0_4, %c0_5] : memref<1x512xf32, #tpu.memory_space<vmem>>, vector<1x512xf32>
    %5 = vector.broadcast %4 : vector<1x512xf32> to vector<16x512xf32>
    %6 = arith.addf %3, %5 : vector<16x512xf32>
    %c0_6 = arith.constant 0 : index
    %c0_7 = arith.constant 0 : index
    %c0_8 = arith.constant 0 : index
    %7 = vector.load %arg4[%c0_6, %c0_7, %c0_8] : memref<1x16x512xf32, #tpu.memory_space<vmem>>, vector<1x16x512xf32>
    %8 = vector.shape_cast %7 : vector<1x16x512xf32> to vector<16x512xf32>
    %9 = vector.shape_cast %6 : vector<16x512xf32> to vector<1x16x512xf32>
    tpu.vector_store %arg4[%c0_6, %c0_7, %c0_8], %9 {strides = array<i32>} : memref<1x16x512xf32, #tpu.memory_space<vmem>>, vector<1x16x512xf32>,
    return
  }
  func.func @transform_0(%arg0: i32) -> (i32, i32, i32) {
    %c0_i32 = arith.constant 0 : i32
    %c0_i32_0 = arith.constant 0 : i32
    %c0_i32_1 = arith.constant 0 : i32
    return %arg0, %c0_i32, %c0_i32_0 : i32, i32, i32
  }
  func.func @transform_1(%arg0: i32) -> (i32, i32) {
    %c0_i32 = arith.constant 0 : i32
    %c0_i32_0 = arith.constant 0 : i32
    %c0_i32_1 = arith.constant 0 : i32
    return %c0_i32, %c0_i32_0 : i32, i32
  }
  func.func @transform_2(%arg0: i32) -> (i32, i32) {
    %c0_i32 = arith.constant 0 : i32
    %c0_i32_0 = arith.constant 0 : i32
    %c0_i32_1 = arith.constant 0 : i32
    return %c0_i32, %c0_i32_0 : i32, i32
  }
  func.func @transform_3(%arg0: i32) -> (i32, i32, i32) {
    %c0_i32 = arith.constant 0 : i32
    %c0_i32_0 = arith.constant 0 : i32
    %c0_i32_1 = arith.constant 0 : i32
    return %arg0, %c0_i32, %c0_i32_0 : i32, i32, i32
  }
}

</mosaic_0001>

<llo_original>
// kernel: tile.8
$region0: #{tile.8}
  #allocation0 [shape = 's32[1]{0}', space=sflag, size = 0x4, scoped, tag = 'scoped memory for tile.8']
  %s0 = inlined_call_operand.vmem [shape: f32[8], index: 0, kind: input, shape index: {}]
  %s1 = inlined_call_operand.vmem [shape: f32[64,8], index: 1, kind: output, shape index: {}]
  // Predicated region
  $region2: #{tile.8} parent=0 // pred_check
    _
  $region3: #{tile.8} parent=0 // pred_check_branch
    %3 = sbr.rel (0) target = $region5
  $region4: #{tile.8} parent=0 // pred_region
    _
  $region5: #{tile.8} parent=0 // pred_fallthru
    _
  %v4 = vld [vmem:[%s0] ss:$0 sm:$0xff]
  %5 = vst [vmem:[%s1] sm:$0xff] %v4
  %s6 = scalar_lea.vmem %s1, 8
  %7 = vst [vmem:[%s6] sm:$0xff] %v4
  %s8 = scalar_lea.vmem %s1, 16
  %9 = vst [vmem:[%s8] sm:$0xff] %v4
  %s10 = scalar_lea.vmem %s1, 24
  %11 = vst [vmem:[%s10] sm:$0xff] %v4
  %s12 = scalar_lea.vmem %s1, 32
  %13 = vst [vmem:[%s12] sm:$0xff] %v4
  %s14 = scalar_lea.vmem %s1, 40
  %15 = vst [vmem:[%s14] sm:$0xff] %v4
  %s16 = scalar_lea.vmem %s1, 48
  %17 = vst [vmem:[%s16] sm:$0xff] %v4
  %s18 = scalar_lea.vmem %s1, 56
  %19 = vst [vmem:[%s18] sm:$0xff] %v4

// kernel: tile.9
$region0: #{tile.9}
  %s0 = inlined_call_operand.vmem [shape: f32[64,8], index: 0, kind: input, shape index: {}]
  %s1 = inlined_call_operand.vmem [shape: f32[1,512], index: 1, kind: output, shape index: {}]
  $region1: #{tile.9} parent=0
    #allocation0 [shape = 'u8[16384]{0}', space=vmem, size = 0x4000, scoped, tag = 'scoped mem for output reshape']
    %s2 = smov 3
    %v3 = vld [vmem:[%s0] ss:$16 sm:%s2]
    %s4 = smov 12
    %v5 = vld [vmem:[%s0] ss:$16 sm:%s4]
    %vm6 = vcmask 1043458
    %v7 = vsel %vm6, %v5, %v3
    %vm8 = vcmask 64512
    %9 = vst.msk [vmem:[#allocation0] ss:$8 sm:$0xf] %vm8, %v7
    %s10 = scalar_lea.vmem %s0, 15
    %s11 = smov 3
    %v12 = vld [vmem:[%s10] ss:$16 sm:%s11]
    %s13 = scalar_lea.vmem %s0, 15
    %s14 = smov 12
    %v15 = vld [vmem:[%s13] ss:$16 sm:%s14]
    %vm16 = vcmask 1043458
    %v17 = vsel %vm16, %v15, %v12
    %18 = vrot.lane.b32.xlu0 %v17, 120
    %v19 = vpop.permute.xlu0 %18
    %vm20 = vcmask 1048512
    %21 = vst.msk [vmem:[#allocation0] ss:$8 sm:$0xf] %vm20, %v19
    %s22 = scalar_lea.vmem %s0, 14
    %s23 = smov 3
    %v24 = vld [vmem:[%s22] ss:$16 sm:%s23]
    %s25 = scalar_lea.vmem %s0, 14
    %s26 = smov 12
    %v27 = vld [vmem:[%s25] ss:$16 sm:%s26]
    %vm28 = vcmask 1043458
    %v29 = vsel %vm28, %v27, %v24
    %30 = vrot.lane.b32.xlu0 %v29, 112
    %v31 = vpop.permute.xlu0 %30
    %vm32 = vcmask 982912
    %33 = vst.msk [vmem:[#allocation0] ss:$8 sm:$0xf] %vm32, %v31
    %s34 = scalar_lea.vmem %s0, 13
    %s35 = smov 3
    %v36 = vld [vmem:[%s34] ss:$16 sm:%s35]
    %s37 = scalar_lea.vmem %s0, 13
    %s38 = smov 12
    %v39 = vld [vmem:[%s37] ss:$16 sm:%s38]
    %vm40 = vcmask 1043458
    %v41 = vsel %vm40, %v39, %v36
    %42 = vrot.lane.b32.xlu0 %v41, 104
    %v43 = vpop.permute.xlu0 %42
    %vm44 = vcmask 917312
    %45 = vst.msk [vmem:[#allocation0] ss:$8 sm:$0xf] %vm44, %v43
    %s46 = scalar_lea.vmem %s0, 12
    %s47 = smov 3
    %v48 = vld [vmem:[%s46] ss:$16 sm:%s47]
    %s49 = scalar_lea.vmem %s0, 12
    %s50 = smov 12
    %v51 = vld [vmem:[%s49] ss:$16 sm:%s50]
    %vm52 = vcmask 1043458
    %v53 = vsel %vm52, %v51, %v48
    %54 = vrot.lane.b32.xlu0 %v53, 96
    %v55 = vpop.permute.xlu0 %54
    %vm56 = vcmask 851712
    %57 = vst.msk [vmem:[#allocation0] ss:$8 sm:$0xf] %vm56, %v55
    %s58 = scalar_lea.vmem %s0, 11
    %s59 = smov 3
    %v60 = vld [vmem:[%s58] ss:$16 sm:%s59]
    %s61 = scalar_lea.vmem %s0, 11
    %s62 = smov 12
    %v63 = vld [vmem:[%s61] ss:$16 sm:%s62]
    %vm64 = vcmask 1043458
    %v65 = vsel %vm64, %v63, %v60
    %66 = vrot.lane.b32.xlu0 %v65, 88
    %v67 = vpop.permute.xlu0 %66
    %vm68 = vcmask 786112
    %69 = vst.msk [vmem:[#allocation0] ss:$8 sm:$0xf] %vm68, %v67
    %s70 = scalar_lea.vmem %s0, 10
    %s71 = smov 3
    %v72 = vld [vmem:[%s70] ss:$16 sm:%s71]
    %s73 = scalar_lea.vmem %s0, 10
    %s74 = smov 12
    %v75 = vld [vmem:[%s73] ss:$16 sm:%s74]
    %vm76 = vcmask 1043458
    %v77 = vsel %vm76, %v75, %v72
    %78 = vrot.lane.b32.xlu0 %v77, 80
    %v79 = vpop.permute.xlu0 %78
    %vm80 = vcmask 720512
    %81 = vst.msk [vmem:[#allocation0] ss:$8 sm:$0xf] %vm80, %v79
    %s82 = scalar_lea.vmem %s0, 9
    %s83 = smov 3
    %v84 = vld [vmem:[%s82] ss:$16 sm:%s83]
    %s85 = scalar_lea.vmem %s0, 9
    %s86 = smov 12
    %v87 = vld [vmem:[%s85] ss:$16 sm:%s86]
    %vm88 = vcmask 1043458
    %v89 = vsel %vm88, %v87, %v84
    %90 = vrot.lane.b32.xlu0 %v89, 72
    %v91 = vpop.permute.xlu0 %90
    %vm92 = vcmask 654912
    %93 = vst.msk [vmem:[#allocation0] ss:$8 sm:$0xf] %vm92, %v91
    %s94 = scalar_lea.vmem %s0, 8
    %s95 = smov 3
    %v96 = vld [vmem:[%s94] ss:$16 sm:%s95]
    %s97 = scalar_lea.vmem %s0, 8
    %s98 = smov 12
    %v99 = vld [vmem:[%s97] ss:$16 sm:%s98]
    %vm100 = vcmask 1043458
    %v101 = vsel %vm100, %v99, %v96
    %102 = vrot.lane.b32.xlu0 %v101, 64
    %v103 = vpop.permute.xlu0 %102
    %vm104 = vcmask 589312
    %105 = vst.msk [vmem:[#allocation0] ss:$8 sm:$0xf] %vm104, %v103
    %s106 = scalar_lea.vmem %s0, 7
    %s107 = smov 3
    %v108 = vld [vmem:[%s106] ss:$16 sm:%s107]
    %s109 = scalar_lea.vmem %s0, 7
    %s110 = smov 12
    %v111 = vld [vmem:[%s109] ss:$16 sm:%s110]
    %vm112 = vcmask 1043458
    %v113 = vsel %vm112, %v111, %v108
    %114 = vrot.lane.b32.xlu0 %v113, 56
    %v115 = vpop.permute.xlu0 %114
    %vm116 = vcmask 523712
    %117 = vst.msk [vmem:[#allocation0] ss:$8 sm:$0xf] %vm116, %v115
    %s118 = scalar_lea.vmem %s0, 6
    %s119 = smov 3
    %v120 = vld [vmem:[%s118] ss:$16 sm:%s119]
    %s121 = scalar_lea.vmem %s0, 6
    %s122 = smov 12
    %v123 = vld [vmem:[%s121] ss:$16 sm:%s122]
    %vm124 = vcmask 1043458
    %v125 = vsel %vm124, %v123, %v120
    %126 = vrot.lane.b32.xlu0 %v125, 48
    %v127 = vpop.permute.xlu0 %126
    %vm128 = vcmask 458112
    %129 = vst.msk [vmem:[#allocation0] ss:$8 sm:$0xf] %vm128, %v127
    %s130 = scalar_lea.vmem %s0, 5
    %s131 = smov 3
    %v132 = vld [vmem:[%s130] ss:$16 sm:%s131]
    %s133 = scalar_lea.vmem %s0, 5
    %s134 = smov 12
    %v135 = vld [vmem:[%s133] ss:$16 sm:%s134]
    %vm136 = vcmask 1043458
    %v137 = vsel %vm136, %v135, %v132
    %138 = vrot.lane.b32.xlu0 %v137, 40
    %v139 = vpop.permute.xlu0 %138
    %vm140 = vcmask 392512
    %141 = vst.msk [vmem:[#allocation0] ss:$8 sm:$0xf] %vm140, %v139
    %s142 = scalar_lea.vmem %s0, 4
    %s143 = smov 3
    %v144 = vld [vmem:[%s142] ss:$16 sm:%s143]
    %s145 = scalar_lea.vmem %s0, 4
    %s146 = smov 12
    %v147 = vld [vmem:[%s145] ss:$16 sm:%s146]
    %vm148 = vcmask 1043458
    %v149 = vsel %vm148, %v147, %v144
    %150 = vrot.lane.b32.xlu0 %v149, 32
    %v151 = vpop.permute.xlu0 %150
    %vm152 = vcmask 326912
    %153 = vst.msk [vmem:[#allocation0] ss:$8 sm:$0xf] %vm152, %v151
    %s154 = scalar_lea.vmem %s0, 3
    %s155 = smov 3
    %v156 = vld [vmem:[%s154] ss:$16 sm:%s155]
    %s157 = scalar_lea.vmem %s0, 3
    %s158 = smov 12
    %v159 = vld [vmem:[%s157] ss:$16 sm:%s158]
    %vm160 = vcmask 1043458
    %v161 = vsel %vm160, %v159, %v156
    %162 = vrot.lane.b32.xlu0 %v161, 24
    %v163 = vpop.permute.xlu0 %162
    %vm164 = vcmask 261312
    %165 = vst.msk [vmem:[#allocation0] ss:$8 sm:$0xf] %vm164, %v163
    %s166 = scalar_lea.vmem %s0, 2
    %s167 = smov 3
    %v168 = vld [vmem:[%s166] ss:$16 sm:%s167]
    %s169 = scalar_lea.vmem %s0, 2
    %s170 = smov 12
    %v171 = vld [vmem:[%s169] ss:$16 sm:%s170]
    %vm172 = vcmask 1043458
    %v173 = vsel %vm172, %v171, %v168
    %174 = vrot.lane.b32.xlu0 %v173, 16
    %v175 = vpop.permute.xlu0 %174
    %vm176 = vcmask 195712
    %177 = vst.msk [vmem:[#allocation0] ss:$8 sm:$0xf] %vm176, %v175
    %s178 = scalar_lea.vmem %s0, 1
    %s179 = smov 3
    %v180 = vld [vmem:[%s178] ss:$16 sm:%s179]
    %s181 = scalar_lea.vmem %s0, 1
    %s182 = smov 12
    %v183 = vld [vmem:[%s181] ss:$16 sm:%s182]
    %vm184 = vcmask 1043458
    %v185 = vsel %vm184, %v183, %v180
    %186 = vrot.lane.b32.xlu0 %v185, 8
    %v187 = vpop.permute.xlu0 %186
    %vm188 = vcmask 130112
    %189 = vst.msk [vmem:[#allocation0] ss:$8 sm:$0xf] %vm188, %v187
    %s191 = sshllo.u32 0, 1
    %v193 = vld [vmem:[#allocation0] sm:%s191]
    %s194 = sshllo.u32 0, 1
    %195 = vst [vmem:[%s1] sm:%s194] %v193
    %s196 = scalar_lea.vmem [#allocation0], 8
    %v197 = vld [vmem:[%s196] sm:%s191]
    %s198 = sshllo.u32 0, 1
    %s199 = scalar_lea.vmem %s1, 1
    %200 = vst [vmem:[%s199] sm:%s198] %v197
    %s201 = scalar_lea.vmem [#allocation0], 16
    %v202 = vld [vmem:[%s201] sm:%s191]
    %s203 = sshllo.u32 0, 1
    %s204 = smul.addr 1, 2
    %s205 = scalar_lea.vmem %s1, %s204
    %206 = vst [vmem:[%s205] sm:%s203] %v202
    %s207 = scalar_lea.vmem [#allocation0], 24
    %v208 = vld [vmem:[%s207] sm:%s191]
    %s209 = sshllo.u32 0, 1
    %s210 = smul.addr 1, 3
    %s211 = scalar_lea.vmem %s1, %s210
    %212 = vst [vmem:[%s211] sm:%s209] %v208

// kernel: upsample.1
$region0: #{upsample.1}
  #allocation0 [shape = 'u32[]', space=smem, size = 0x4, offset = 0x4, fixed_abs, tag = 'smem constant byte address 0x4 - core index']
  #allocation1 [shape = 'u32[144,128]{1,0:T(1,128)}', space=vmem, size = 0x12000, scoped, tag = 'internal scratch']
  %s0 = inlined_call_operand.vmem [shape: f32[2,16,256], index: 0, kind: input, shape index: {}]
  %s1 = inlined_call_operand.vmem [shape: f32[256,512], index: 1, kind: input, shape index: {}]
  %s2 = inlined_call_operand.vmem [shape: f32[1,512], index: 2, kind: input, shape index: {}]
  %s3 = inlined_call_operand.vmem [shape: f32[2,16,512], index: 3, kind: output, shape index: {}]
  %s4 = sld [smem:[#allocation0]]
  $region45: #{upsample.1} parent=0
    _
  %s6 = ssub.s32 1, %s4
  %s7 = scalar_select 0, %s6, %s4
  loop: start=0, step=1, limit=4
  $region2: #{upsample.1} parent=0 // loop_pre_header
    _
  $region3: #{upsample.1} parent=0 // loop_header
    %s9 = sphi 0, %s13
    %p10 = scmp.ge.s32.totalorder %s9, 4
    %s19 = sphi 0, %s21
    %s22 = sphi 0, %s19
    %s23 = sphi 0, %s22
    %s39 = sphi 0, %s23
    %s43 = sphi 0, %s43
    %s45 = sphi 0, %s43
    %s46 = sphi 0, %s45
    %s60 = sphi 0, %s46
    %s64 = sphi 0, %s64
    %s66 = sphi 0, %s64
    %s67 = sphi 0, %s66
    %s81 = sphi 0, %s67
    %s87 = sphi 0, %s89
    %s90 = sphi 0, %s87
    %s91 = sphi 0, %s90
    %s107 = sphi 0, %s91
  $region4: #{upsample.1} parent=0 // loop_header_branch
    %12 = sbr.rel (%p10) target = $region8
  $region5: #{upsample.1} parent=0 // loop_body
    %s14 = ssub.s32 %s9, 1
    %s15 = ssub.s32 %s9, 2
    %s16 = sadd.s32 %s9, 1
    %s17 = ssub.s32 %s9, %s16
    %p18 = scmp.eq.s32.totalorder %s17, 0
    %s20 = sadd.s32 %s19, 1
    %s21 = scalar_select %p18, %s19, %s20
    %p24 = pneg %p18
    %p25 = scmp.eq.s32.totalorder %s9, 1
    %p26 = por %p24, %p25
    %p27 = scmp.ne.s32.totalorder %s19, %s22
    %p28 = scmp.eq.s32.totalorder %s9, 0
    %p29 = por %p27, %p28
    %p30 = scmp.ne.s32.totalorder %s19, %s22
    %p31 = scmp.eq.s32.totalorder %s14, 1
    %p32 = por %p30, %p31
    %p33 = scmp.ne.s32.totalorder %s22, %s23
    %p34 = scmp.eq.s32.totalorder %s14, 0
    %p35 = por %p33, %p34
    %p36 = scmp.ne.s32.totalorder %s22, %s23
    %p37 = scmp.eq.s32.totalorder %s15, 1
    %p38 = por %p36, %p37
    %p40 = scmp.ne.s32.totalorder %s23, %s39
    %p41 = scmp.eq.s32.totalorder %s15, 0
    %p42 = por %p40, %p41
    %s44 = sadd.s32 %s43, 1
    %p47 = scmp.eq.s32.totalorder %s9, 1
    %p48 = scmp.ne.s32.totalorder %s43, %s45
    %p49 = scmp.eq.s32.totalorder %s9, 0
    %p50 = por %p48, %p49
    %p51 = scmp.ne.s32.totalorder %s43, %s45
    %p52 = scmp.eq.s32.totalorder %s14, 1
    %p53 = por %p51, %p52
    %p54 = scmp.ne.s32.totalorder %s45, %s46
    %p55 = scmp.eq.s32.totalorder %s14, 0
    %p56 = por %p54, %p55
    %p57 = scmp.ne.s32.totalorder %s45, %s46
    %p58 = scmp.eq.s32.totalorder %s15, 1
    %p59 = por %p57, %p58
    %p61 = scmp.ne.s32.totalorder %s46, %s60
    %p62 = scmp.eq.s32.totalorder %s15, 0
    %p63 = por %p61, %p62
    %s65 = sadd.s32 %s64, 1
    %p68 = scmp.eq.s32.totalorder %s9, 1
    %p69 = scmp.ne.s32.totalorder %s64, %s66
    %p70 = scmp.eq.s32.totalorder %s9, 0
    %p71 = por %p69, %p70
    %p72 = scmp.ne.s32.totalorder %s64, %s66
    %p73 = scmp.eq.s32.totalorder %s14, 1
    %p74 = por %p72, %p73
    %p75 = scmp.ne.s32.totalorder %s66, %s67
    %p76 = scmp.eq.s32.totalorder %s14, 0
    %p77 = por %p75, %p76
    %p78 = scmp.ne.s32.totalorder %s66, %s67
    %p79 = scmp.eq.s32.totalorder %s15, 1
    %p80 = por %p78, %p79
    %p82 = scmp.ne.s32.totalorder %s67, %s81
    %p83 = scmp.eq.s32.totalorder %s15, 0
    %p84 = por %p82, %p83
    %s85 = ssub.s32 %s9, %s16
    %p86 = scmp.eq.s32.totalorder %s85, 0
    %s88 = sadd.s32 %s87, 1
    %s89 = scalar_select %p86, %s87, %s88
    %p92 = pneg %p86
    %p93 = scmp.eq.s32.totalorder %s9, 1
    %p94 = por %p92, %p93
    %p95 = scmp.ne.s32.totalorder %s87, %s90
    %p96 = scmp.eq.s32.totalorder %s9, 0
    %p97 = por %p95, %p96
    %p98 = scmp.ne.s32.totalorder %s87, %s90
    %p99 = scmp.eq.s32.totalorder %s14, 1
    %p100 = por %p98, %p99
    %p101 = scmp.ne.s32.totalorder %s90, %s91
    %p102 = scmp.eq.s32.totalorder %s14, 0
    %p103 = por %p101, %p102
    %p104 = scmp.ne.s32.totalorder %s90, %s91
    %p105 = scmp.eq.s32.totalorder %s15, 1
    %p106 = por %p104, %p105
    %p108 = scmp.ne.s32.totalorder %s91, %s107
    %p109 = scmp.eq.s32.totalorder %s15, 0
    %p110 = por %p108, %p109
    %p111 = scmp.le.s32.totalorder 1, %s9
    %p112 = scmp.lt.s32.totalorder %s9, 3
    %p113 = pnand %p111, %p112
    %p114 = pneg %p113
    // Predicated region
    $region9: #{upsample.1} parent=5 // pred_check
      _
    $region10: #{upsample.1} parent=5 // pred_check_branch
      %116 = sbr.rel (%p113) target = $region12
    $region11: #{upsample.1} parent=5 // pred_region
      %s117 = ssub.s32 %s9, 1
      // Predicated region
      $region13: #{upsample.1} parent=11 // pred_check
        %p118 = pneg %p56
      $region14: #{upsample.1} parent=11 // pred_check_branch
        %120 = sbr.rel (%p118) target = $region16
      $region15: #{upsample.1} parent=11 // pred_region
        _
      $region16: #{upsample.1} parent=11 // pred_fallthru
        _
      // Predicated region
      $region17: #{upsample.1} parent=11 // pred_check
        %p121 = pneg %p77
      $region18: #{upsample.1} parent=11 // pred_check_branch
        %123 = sbr.rel (%p121) target = $region20
      $region19: #{upsample.1} parent=11 // pred_region
        _
      $region20: #{upsample.1} parent=11 // pred_fallthru
        _
    $region12: #{upsample.1} parent=5 // pred_fallthru
      _
    %p124 = scmp.lt.s32.totalorder %s9, 2
    // Predicated region
    $region21: #{upsample.1} parent=5 // pred_check
      %p125 = pneg %p124
    $region22: #{upsample.1} parent=5 // pred_check_branch
      %127 = sbr.rel (%p125) target = $region24
    $region23: #{upsample.1} parent=5 // pred_region
      // Predicated region
      $region25: #{upsample.1} parent=23 // pred_check
        %p128 = pneg %p29
      $region26: #{upsample.1} parent=23 // pred_check_branch
        %130 = sbr.rel (%p128) target = $region28
      $region27: #{upsample.1} parent=23 // pred_region
        %p131 = scmp.lt.s32.totalorder %s9, 1
        %s132 = scalar_select %p131, %s9, 1
        %s133 = smul.addr %s132, 4
        %s134 = smul.addr %s133, 8
        %s135 = scalar_lea.vmem %s0, %s134
      $region28: #{upsample.1} parent=23 // pred_fallthru
        _
    $region24: #{upsample.1} parent=5 // pred_fallthru
      _
    %p136 = scmp.le.s32.totalorder 1, %s9
    %p137 = scmp.lt.s32.totalorder %s9, 3
    %p138 = pnand %p136, %p137
    %p139 = pneg %p138
    // Predicated region
    $region29: #{upsample.1} parent=5 // pred_check
      _
    $region30: #{upsample.1} parent=5 // pred_check_branch
      %141 = sbr.rel (%p138) target = $region32
    $region31: #{upsample.1} parent=5 // pred_region
      %s142 = ssub.s32 %s9, 1
      %p143 = scmp.lt.s32.totalorder %s14, 1
      %s144 = scalar_select %p143, %s14, 1
      %s145 = smul.addr %s144, 4
      %s146 = smul.addr %s145, 8
      %s147 = scalar_lea.vmem %s0, %s146
      %p148 = pneg %p35
      %p149 = pneg %p32
      %p150 = pneg %p56
      %p151 = pneg %p53
      %p152 = pneg %p77
      %p153 = pneg %p74
      %p154 = pneg %p103
      %p155 = pneg %p100
      %p156 = scmp.lt.s32.totalorder %s14, 1
      %s157 = scalar_select %p156, %s14, 1
      %s158 = smul.addr %s157, 8
      %s159 = smul.addr %s158, 8
      %s160 = scalar_lea.vmem %s3, %s159
      %p161 = scmp.lt.s32.totalorder %s14, 1
      %s162 = scalar_select %p161, %s14, 1
      %s163 = smul.addr %s162, 4
      %s164 = smul.addr %s163, 8
      %s165 = scalar_lea.vmem %s0, %s164
      %p166 = scmp.lt.s32.totalorder %s14, 1
      %s167 = scalar_select %p166, %s14, 1
      %s168 = smul.addr %s167, 8
      %s169 = smul.addr %s168, 8
      %s170 = scalar_lea.vmem %s3, %s169
      %v171 = vld [vmem:[%s165] sm:$0xff]
      %v172 = vld [vmem:[%s165 + $0x8] sm:$0xff]
      %v173 = vld [vmem:[%s165 + $0x10] sm:$0xff]
      %v174 = vld [vmem:[%s165 + $0x18] sm:$0xff]
      %v175 = vld [vmem:[%s1] sm:$0xff]
      %v176 = vld [vmem:[%s1 + $0x8] sm:$0xff]
      %v177 = vld [vmem:[%s1 + $0x10] sm:$0xff]
      %v178 = vld [vmem:[%s1 + $0x18] sm:$0xff]
      %v179 = vld [vmem:[%s1 + $0x20] sm:$0xff]
      %v180 = vld [vmem:[%s1 + $0x28] sm:$0xff]
      %v181 = vld [vmem:[%s1 + $0x30] sm:$0xff]
      %v182 = vld [vmem:[%s1 + $0x38] sm:$0xff]
      %v183 = vld [vmem:[%s1 + $0x40] sm:$0xff]
      %v184 = vld [vmem:[%s1 + $0x48] sm:$0xff]
      %v185 = vld [vmem:[%s1 + $0x50] sm:$0xff]
      %v186 = vld [vmem:[%s1 + $0x58] sm:$0xff]
      %v187 = vld [vmem:[%s1 + $0x60] sm:$0xff]
      %v188 = vld [vmem:[%s1 + $0x68] sm:$0xff]
      %v189 = vld [vmem:[%s1 + $0x70] sm:$0xff]
      %v190 = vld [vmem:[%s1 + $0x78] sm:$0xff]
      %v191 = vld [vmem:[%s1 + $0x80] sm:$0xff]
      %v192 = vld [vmem:[%s1 + $0x88] sm:$0xff]
      %v193 = vld [vmem:[%s1 + $0x90] sm:$0xff]
      %v194 = vld [vmem:[%s1 + $0x98] sm:$0xff]
      %v195 = vld [vmem:[%s1 + $0xa0] sm:$0xff]
      %v196 = vld [vmem:[%s1 + $0xa8] sm:$0xff]
      %v197 = vld [vmem:[%s1 + $0xb0] sm:$0xff]
      %v198 = vld [vmem:[%s1 + $0xb8] sm:$0xff]
      %v199 = vld [vmem:[%s1 + $0xc0] sm:$0xff]
      %v200 = vld [vmem:[%s1 + $0xc8] sm:$0xff]
      %v201 = vld [vmem:[%s1 + $0xd0] sm:$0xff]
      %v202 = vld [vmem:[%s1 + $0xd8] sm:$0xff]
      %v203 = vld [vmem:[%s1 + $0xe0] sm:$0xff]
      %v204 = vld [vmem:[%s1 + $0xe8] sm:$0xff]
      %v205 = vld [vmem:[%s1 + $0xf0] sm:$0xff]
      %v206 = vld [vmem:[%s1 + $0xf8] sm:$0xff]
      %v207 = vld [vmem:[%s1 + $0x100] sm:$0xff]
      %v208 = vld [vmem:[%s1 + $0x108] sm:$0xff]
      %v209 = vld [vmem:[%s1 + $0x110] sm:$0xff]
      %v210 = vld [vmem:[%s1 + $0x118] sm:$0xff]
      %v211 = vld [vmem:[%s1 + $0x120] sm:$0xff]
      %v212 = vld [vmem:[%s1 + $0x128] sm:$0xff]
      %v213 = vld [vmem:[%s1 + $0x130] sm:$0xff]
      %v214 = vld [vmem:[%s1 + $0x138] sm:$0xff]
      %v215 = vld [vmem:[%s1 + $0x140] sm:$0xff]
      %v216 = vld [vmem:[%s1 + $0x148] sm:$0xff]
      %v217 = vld [vmem:[%s1 + $0x150] sm:$0xff]
      %v218 = vld [vmem:[%s1 + $0x158] sm:$0xff]
      %v219 = vld [vmem:[%s1 + $0x160] sm:$0xff]
      %v220 = vld [vmem:[%s1 + $0x168] sm:$0xff]
      %v221 = vld [vmem:[%s1 + $0x170] sm:$0xff]
      %v222 = vld [vmem:[%s1 + $0x178] sm:$0xff]
      %v223 = vld [vmem:[%s1 + $0x180] sm:$0xff]
      %v224 = vld [vmem:[%s1 + $0x188] sm:$0xff]
      %v225 = vld [vmem:[%s1 + $0x190] sm:$0xff]
      %v226 = vld [vmem:[%s1 + $0x198] sm:$0xff]
      %v227 = vld [vmem:[%s1 + $0x1a0] sm:$0xff]
      %v228 = vld [vmem:[%s1 + $0x1a8] sm:$0xff]
      %v229 = vld [vmem:[%s1 + $0x1b0] sm:$0xff]
      %v230 = vld [vmem:[%s1 + $0x1b8] sm:$0xff]
      %v231 = vld [vmem:[%s1 + $0x1c0] sm:$0xff]
      %v232 = vld [vmem:[%s1 + $0x1c8] sm:$0xff]
      %v233 = vld [vmem:[%s1 + $0x1d0] sm:$0xff]
      %v234 = vld [vmem:[%s1 + $0x1d8] sm:$0xff]
      %v235 = vld [vmem:[%s1 + $0x1e0] sm:$0xff]
      %v236 = vld [vmem:[%s1 + $0x1e8] sm:$0xff]
      %v237 = vld [vmem:[%s1 + $0x1f0] sm:$0xff]
      %v238 = vld [vmem:[%s1 + $0x1f8] sm:$0xff]
      %v239 = vld [vmem:[%s1 + $0x200] sm:$0xff]
      %v240 = vld [vmem:[%s1 + $0x208] sm:$0xff]
      %v241 = vld [vmem:[%s1 + $0x210] sm:$0xff]
      %v242 = vld [vmem:[%s1 + $0x218] sm:$0xff]
      %v243 = vld [vmem:[%s1 + $0x220] sm:$0xff]
      %v244 = vld [vmem:[%s1 + $0x228] sm:$0xff]
      %v245 = vld [vmem:[%s1 + $0x230] sm:$0xff]
      %v246 = vld [vmem:[%s1 + $0x238] sm:$0xff]
      %v247 = vld [vmem:[%s1 + $0x240] sm:$0xff]
      %v248 = vld [vmem:[%s1 + $0x248] sm:$0xff]
      %v249 = vld [vmem:[%s1 + $0x250] sm:$0xff]
      %v250 = vld [vmem:[%s1 + $0x258] sm:$0xff]
      %v251 = vld [vmem:[%s1 + $0x260] sm:$0xff]
      %v252 = vld [vmem:[%s1 + $0x268] sm:$0xff]
      %v253 = vld [vmem:[%s1 + $0x270] sm:$0xff]
      %v254 = vld [vmem:[%s1 + $0x278] sm:$0xff]
      %v255 = vld [vmem:[%s1 + $0x280] sm:$0xff]
      %v256 = vld [vmem:[%s1 + $0x288] sm:$0xff]
      %v257 = vld [vmem:[%s1 + $0x290] sm:$0xff]
      %v258 = vld [vmem:[%s1 + $0x298] sm:$0xff]
      %v259 = vld [vmem:[%s1 + $0x2a0] sm:$0xff]
      %v260 = vld [vmem:[%s1 + $0x2a8] sm:$0xff]
      %v261 = vld [vmem:[%s1 + $0x2b0] sm:$0xff]
      %v262 = vld [vmem:[%s1 + $0x2b8] sm:$0xff]
      %v263 = vld [vmem:[%s1 + $0x2c0] sm:$0xff]
      %v264 = vld [vmem:[%s1 + $0x2c8] sm:$0xff]
      %v265 = vld [vmem:[%s1 + $0x2d0] sm:$0xff]
      %v266 = vld [vmem:[%s1 + $0x2d8] sm:$0xff]
      %v267 = vld [vmem:[%s1 + $0x2e0] sm:$0xff]
      %v268 = vld [vmem:[%s1 + $0x2e8] sm:$0xff]
      %v269 = vld [vmem:[%s1 + $0x2f0] sm:$0xff]
      %v270 = vld [vmem:[%s1 + $0x2f8] sm:$0xff]
      %v271 = vld [vmem:[%s1 + $0x300] sm:$0xff]
      %v272 = vld [vmem:[%s1 + $0x308] sm:$0xff]
      %v273 = vld [vmem:[%s1 + $0x310] sm:$0xff]
      %v274 = vld [vmem:[%s1 + $0x318] sm:$0xff]
      %v275 = vld [vmem:[%s1 + $0x320] sm:$0xff]
      %v276 = vld [vmem:[%s1 + $0x328] sm:$0xff]
      %v277 = vld [vmem:[%s1 + $0x330] sm:$0xff]
      %v278 = vld [vmem:[%s1 + $0x338] sm:$0xff]
      %v279 = vld [vmem:[%s1 + $0x340] sm:$0xff]
      %v280 = vld [vmem:[%s1 + $0x348] sm:$0xff]
      %v281 = vld [vmem:[%s1 + $0x350] sm:$0xff]
      %v282 = vld [vmem:[%s1 + $0x358] sm:$0xff]
      %v283 = vld [vmem:[%s1 + $0x360] sm:$0xff]
      %v284 = vld [vmem:[%s1 + $0x368] sm:$0xff]
      %v285 = vld [vmem:[%s1 + $0x370] sm:$0xff]
      %v286 = vld [vmem:[%s1 + $0x378] sm:$0xff]
      %v287 = vld [vmem:[%s1 + $0x380] sm:$0xff]
      %v288 = vld [vmem:[%s1 + $0x388] sm:$0xff]
      %v289 = vld [vmem:[%s1 + $0x390] sm:$0xff]
      %v290 = vld [vmem:[%s1 + $0x398] sm:$0xff]
      %v291 = vld [vmem:[%s1 + $0x3a0] sm:$0xff]
      %v292 = vld [vmem:[%s1 + $0x3a8] sm:$0xff]
      %v293 = vld [vmem:[%s1 + $0x3b0] sm:$0xff]
      %v294 = vld [vmem:[%s1 + $0x3b8] sm:$0xff]
      %v295 = vld [vmem:[%s1 + $0x3c0] sm:$0xff]
      %v296 = vld [vmem:[%s1 + $0x3c8] sm:$0xff]
      %v297 = vld [vmem:[%s1 + $0x3d0] sm:$0xff]
      %v298 = vld [vmem:[%s1 + $0x3d8] sm:$0xff]
      %v299 = vld [vmem:[%s1 + $0x3e0] sm:$0xff]
      %v300 = vld [vmem:[%s1 + $0x3e8] sm:$0xff]
      %v301 = vld [vmem:[%s1 + $0x3f0] sm:$0xff]
      %v302 = vld [vmem:[%s1 + $0x3f8] sm:$0xff]
      %v303 = vld [vmem:[%s2] sm:$0xf]
      %v305 = vlaneseq
      %v306 = vshrl.u32 %v305, 7
      %v307 = vsub.s32 0, %v306
      %v308 = vrot.slane %v303, %v307
      %v309 = vlaneseq
      %v310 = vshrl.u32 %v309, 7
      %v311 = vsub.s32 1, %v310
      %v312 = vrot.slane %v303, %v311
      %v313 = vlaneseq
      %v314 = vshrl.u32 %v313, 7
      %v315 = vsub.s32 2, %v314
      %v316 = vrot.slane %v303, %v315
      %v317 = vlaneseq
      %v318 = vshrl.u32 %v317, 7
      %v319 = vsub.s32 3, %v318
      %v320 = vrot.slane %v303, %v319
      %325 = vmatprep.subr.mxu0 %v176
      %326 = vmatpush1.msra.mxu0 %v175
      %327 = vmatprep.subr.mxu0 %v180
      %328 = vmatpush1.msra.mxu0 %v179
      %329 = vmatprep.subr.mxu0 %v184
      %330 = vmatpush1.msra.mxu0 %v183
      %331 = vmatprep.subr.mxu0 %v188
      %332 = vmatpush1.msra.mxu0 %v187
      %333 = vmatprep.subr.mxu0 %v192
      %334 = vmatpush1.msra.mxu0 %v191
      %335 = vmatprep.subr.mxu0 %v196
      %336 = vmatpush1.msra.mxu0 %v195
      %337 = vmatprep.subr.mxu0 %v200
      %338 = vmatpush1.msra.mxu0 %v199
      %339 = vmatprep.subr.mxu0 %v204
      %340 = vmatpush1.msra.mxu0 %v203
      %341 = vmatprep.subr.mxu0 %v208
      %342 = vmatpush1.msra.mxu0 %v207
      %343 = vmatprep.subr.mxu0 %v212
      %344 = vmatpush1.msra.mxu0 %v211
      %345 = vmatprep.subr.mxu0 %v216
      %346 = vmatpush1.msra.mxu0 %v215
      %347 = vmatprep.subr.mxu0 %v220
      %348 = vmatpush1.msra.mxu0 %v219
      %349 = vmatprep.subr.mxu0 %v224
      %350 = vmatpush1.msra.mxu0 %v223
      %351 = vmatprep.subr.mxu0 %v228
      %352 = vmatpush1.msra.mxu0 %v227
      %353 = vmatprep.subr.mxu0 %v232
      %354 = vmatpush1.msra.mxu0 %v231
      %355 = vmatprep.subr.mxu0 %v236
      %356 = vmatpush1.msra.mxu0 %v235
      %357 = vmatprep.subr.mxu0 %v240
      %358 = vmatpush1.msra.mxu0 %v239
      %359 = vmatprep.subr.mxu0 %v244
      %360 = vmatpush1.msra.mxu0 %v243
      %361 = vmatprep.subr.mxu0 %v248
      %362 = vmatpush1.msra.mxu0 %v247
      %363 = vmatprep.subr.mxu0 %v252
      %364 = vmatpush1.msra.mxu0 %v251
      %365 = vmatprep.subr.mxu0 %v256
      %366 = vmatpush1.msra.mxu0 %v255
      %367 = vmatprep.subr.mxu0 %v260
      %368 = vmatpush1.msra.mxu0 %v259
      %369 = vmatprep.subr.mxu0 %v264
      %370 = vmatpush1.msra.mxu0 %v263
      %371 = vmatprep.subr.mxu0 %v268
      %372 = vmatpush1.msra.mxu0 %v267
      %373 = vmatprep.subr.mxu0 %v272
      %374 = vmatpush1.msra.mxu0 %v271
      %375 = vmatprep.subr.mxu0 %v276
      %376 = vmatpush1.msra.mxu0 %v275
      %377 = vmatprep.subr.mxu0 %v280
      %378 = vmatpush1.msra.mxu0 %v279
      %379 = vmatprep.subr.mxu0 %v284
      %380 = vmatpush1.msra.mxu0 %v283
      %381 = vmatprep.subr.mxu0 %v288
      %382 = vmatpush1.msra.mxu0 %v287
      %383 = vmatprep.subr.mxu0 %v292
      %384 = vmatpush1.msra.mxu0 %v291
      %385 = vmatprep.subr.mxu0 %v296
      %386 = vmatpush1.msra.mxu0 %v295
      %387 = vmatprep.subr.mxu0 %v300
      %388 = vmatpush1.msra.mxu0 %v299
      %389 = vmatprep.mubr.f32.mxu0 %v172
      %390 = vmatmul.mubr.f32.gmra.mrb[0].mxu0 %v171
      %v391 = vpop.f32.mrb[0].mxu0
      %v392 = vadd.f32 %v308, %v391
      %v393 = vpop.f32.mrb[0].mxu0
      %v394 = vadd.f32 %v312, %v393
      %395 = vmatprep.mubr.f32.mxu0 %v174
      %396 = vmatmul.mubr.f32.gmra.mrb[0].mxu0 %v173
      %v397 = vpop.f32.mrb[0].mxu0
      %v398 = vadd.f32 %v308, %v397
      %v399 = vpop.f32.mrb[0].mxu0
      %v400 = vadd.f32 %v312, %v399
      %401 = vdwg.mxu0
      %402 = vmatprep.subr.mxu0 %v178
      %403 = vmatpush1.msra.mxu0 %v177
      %404 = vmatprep.subr.mxu0 %v182
      %405 = vmatpush1.msra.mxu0 %v181
      %406 = vmatprep.subr.mxu0 %v186
      %407 = vmatpush1.msra.mxu0 %v185
      %408 = vmatprep.subr.mxu0 %v190
      %409 = vmatpush1.msra.mxu0 %v189
      %410 = vmatprep.subr.mxu0 %v194
      %411 = vmatpush1.msra.mxu0 %v193
      %412 = vmatprep.subr.mxu0 %v198
      %413 = vmatpush1.msra.mxu0 %v197
      %414 = vmatprep.subr.mxu0 %v202
      %415 = vmatpush1.msra.mxu0 %v201
      %416 = vmatprep.subr.mxu0 %v206
      %417 = vmatpush1.msra.mxu0 %v205
      %418 = vmatprep.subr.mxu0 %v210
      %419 = vmatpush1.msra.mxu0 %v209
      %420 = vmatprep.subr.mxu0 %v214
      %421 = vmatpush1.msra.mxu0 %v213
      %422 = vmatprep.subr.mxu0 %v218
      %423 = vmatpush1.msra.mxu0 %v217
      %424 = vmatprep.subr.mxu0 %v222
      %425 = vmatpush1.msra.mxu0 %v221
      %426 = vmatprep.subr.mxu0 %v226
      %427 = vmatpush1.msra.mxu0 %v225
      %428 = vmatprep.subr.mxu0 %v230
      %429 = vmatpush1.msra.mxu0 %v229
      %430 = vmatprep.subr.mxu0 %v234
      %431 = vmatpush1.msra.mxu0 %v233
      %432 = vmatprep.subr.mxu0 %v238
      %433 = vmatpush1.msra.mxu0 %v237
      %434 = vmatprep.subr.mxu0 %v242
      %435 = vmatpush1.msra.mxu0 %v241
      %436 = vmatprep.subr.mxu0 %v246
      %437 = vmatpush1.msra.mxu0 %v245
      %438 = vmatprep.subr.mxu0 %v250
      %439 = vmatpush1.msra.mxu0 %v249
      %440 = vmatprep.subr.mxu0 %v254
      %441 = vmatpush1.msra.mxu0 %v253
      %442 = vmatprep.subr.mxu0 %v258
      %443 = vmatpush1.msra.mxu0 %v257
      %444 = vmatprep.subr.mxu0 %v262
      %445 = vmatpush1.msra.mxu0 %v261
      %446 = vmatprep.subr.mxu0 %v266
      %447 = vmatpush1.msra.mxu0 %v265
      %448 = vmatprep.subr.mxu0 %v270
      %449 = vmatpush1.msra.mxu0 %v269
      %450 = vmatprep.subr.mxu0 %v274
      %451 = vmatpush1.msra.mxu0 %v273
      %452 = vmatprep.subr.mxu0 %v278
      %453 = vmatpush1.msra.mxu0 %v277
      %454 = vmatprep.subr.mxu0 %v282
      %455 = vmatpush1.msra.mxu0 %v281
      %456 = vmatprep.subr.mxu0 %v286
      %457 = vmatpush1.msra.mxu0 %v285
      %458 = vmatprep.subr.mxu0 %v290
      %459 = vmatpush1.msra.mxu0 %v289
      %460 = vmatprep.subr.mxu0 %v294
      %461 = vmatpush1.msra.mxu0 %v293
      %462 = vmatprep.subr.mxu0 %v298
      %463 = vmatpush1.msra.mxu0 %v297
      %464 = vmatprep.subr.mxu0 %v302
      %465 = vmatpush1.msra.mxu0 %v301
      %466 = vmatprep.mubr.f32.mxu0 %v172
      %467 = vmatmul.mubr.f32.gmra.mrb[0].mxu0 %v171
      %v468 = vpop.f32.mrb[0].mxu0
      %v469 = vadd.f32 %v316, %v468
      %v470 = vpop.f32.mrb[0].mxu0
      %v471 = vadd.f32 %v320, %v470
      %472 = vmatprep.mubr.f32.mxu0 %v174
      %473 = vmatmul.mubr.f32.gmra.mrb[0].mxu0 %v173
      %v474 = vpop.f32.mrb[0].mxu0
      %v475 = vadd.f32 %v316, %v474
      %v476 = vpop.f32.mrb[0].mxu0
      %v477 = vadd.f32 %v320, %v476
      %478 = vdwg.mxu0
      %479 = vst [vmem:[%s170] sm:$0xff] %v392
      %480 = vst [vmem:[%s170 + $0x8] sm:$0xff] %v394
      %481 = vst [vmem:[%s170 + $0x10] sm:$0xff] %v469
      %482 = vst [vmem:[%s170 + $0x18] sm:$0xff] %v471
      %483 = vst [vmem:[%s170 + $0x20] sm:$0xff] %v398
      %484 = vst [vmem:[%s170 + $0x28] sm:$0xff] %v400
      %485 = vst [vmem:[%s170 + $0x30] sm:$0xff] %v475
      %486 = vst [vmem:[%s170 + $0x38] sm:$0xff] %v477
      %p487 = scmp.lt.s32.totalorder %s14, 1
      %s488 = scalar_select %p487, %s14, 1
      %s489 = smul.addr %s488, 8
      %s490 = smul.addr %s489, 8
      %s491 = scalar_lea.vmem %s3, %s490
      // Predicated region
      $region33: #{upsample.1} parent=31 // pred_check
        %p492 = pneg %p100
      $region34: #{upsample.1} parent=31 // pred_check_branch
        %494 = sbr.rel (%p492) target = $region36
      $region35: #{upsample.1} parent=31 // pred_region
        _
      $region36: #{upsample.1} parent=31 // pred_fallthru
        _
    $region32: #{upsample.1} parent=5 // pred_fallthru
      _
    %p495 = scmp.le.s32.totalorder 2, %s9
    // Predicated region
    $region37: #{upsample.1} parent=5 // pred_check
      %p496 = pneg %p495
    $region38: #{upsample.1} parent=5 // pred_check_branch
      %498 = sbr.rel (%p496) target = $region40
    $region39: #{upsample.1} parent=5 // pred_region
      %s499 = ssub.s32 %s9, 2
      // Predicated region
      $region41: #{upsample.1} parent=39 // pred_check
        %p500 = pneg %p106
      $region42: #{upsample.1} parent=39 // pred_check_branch
        %502 = sbr.rel (%p500) target = $region44
      $region43: #{upsample.1} parent=39 // pred_region
        %p503 = scmp.lt.s32.totalorder %s15, 1
        %s504 = scalar_select %p503, %s15, 1
        %s505 = smul.addr %s504, 8
        %s506 = smul.addr %s505, 8
        %s507 = scalar_lea.vmem %s3, %s506
      $region44: #{upsample.1} parent=39 // pred_fallthru
        _
    $region40: #{upsample.1} parent=5 // pred_fallthru
      _
  $region6: #{upsample.1} parent=0 // loop_footer
    %s13 = sadd.s32 1, %s9
  $region7: #{upsample.1} parent=0 // loop_footer_branch
    %8 = sbr.rel target = $region3
  $region8: #{upsample.1} parent=0 // loop_exit
    _

</llo_original>
